<compile_context>
chip_gen: v6e
topology: v6e:2x2x1
jax: 0.10.0
libtpu: 0.0.40
codegen_flags: <defaults>
</compile_context>

<pallas_src>
import functools

import jax
import jax.numpy as jnp
from jax.experimental import pallas as pl
from jax.experimental.pallas import tpu as pltpu

_ACC_W = 128          # lane width of the running sum/max accumulators
_MAX_HW_TILE = 2048   # diminishing returns past this per measured tiling data


def _channel_attention_kernel(x_ref, w1_ref, b1_ref, w2_ref, b2_ref, o_ref,
                              sum_acc, max_acc, *,
                              hw_total, hw_tile, acc_w, needs_mask):
    k = pl.program_id(1)
    nk = pl.num_programs(1)
    n_chunks = hw_tile // acc_w

    @pl.when(k == 0)
    def _init():
        sum_acc[...] = jnp.zeros_like(sum_acc)
        max_acc[...] = jnp.full_like(max_acc, -jnp.inf)

    def _fold(masked):
        # Streaming per-lane partial reductions: pure VPU work.  Each hw_tile
        # block is folded into the fixed 128-lane accumulators chunk by chunk
        # (static 128-wide lane slices -> whole vregs, no relayout).
        for ci in range(n_chunks):
            xc = x_ref[:, :, ci * acc_w:(ci + 1) * acc_w].astype(jnp.float32)
            if masked:
                lane = jax.lax.broadcasted_iota(jnp.int32, (1, 1, acc_w), 2)
                valid = (k * hw_tile + ci * acc_w + lane) < hw_total
                sum_acc[...] += jnp.where(valid, xc, 0.0)
                max_acc[...] = jnp.maximum(max_acc[...],
                                           jnp.where(valid, xc, -jnp.inf))
            else:
                sum_acc[...] += xc
                max_acc[...] = jnp.maximum(max_acc[...], xc)

    if needs_mask:
        # Only the LAST hw block can be partial; steady state stays unmasked.
        @pl.when(k < nk - 1)
        def _steady():
            _fold(False)

        @pl.when(k == nk - 1)
        def _tail():
            _fold(True)
    else:
        _fold(False)

    @pl.when(k == nk - 1)
    def _finalize():
        # Single cross-lane (XLU) reduce only at the end of the stream.
        avg = jnp.sum(sum_acc[...], axis=-1) * (1.0 / hw_total)   # (b_tile, C)
        mxx = jnp.max(max_acc[...], axis=-1)                      # (b_tile, C)

        # Weights stay VMEM-resident (constant index_maps); fed to the MXU in
        # their native dtype (bf16 weights avoid an extra f32 pass).
        w1 = w1_ref[...]
        w2 = w2_ref[...]
        b1 = b1_ref[...].astype(jnp.float32)
        b2 = b2_ref[...].astype(jnp.float32)

        bt = avg.shape[0]
        stacked = jnp.concatenate([avg, mxx], axis=0)             # (2*b_tile, C)
        h = jnp.dot(stacked.astype(w1.dtype), w1,
                    preferred_element_type=jnp.float32) + b1
        h = jnp.maximum(h, 0.0)                                   # ReLU(inplace=True)
        y = jnp.dot(h.astype(w2.dtype), w2,
                    preferred_element_type=jnp.float32) + b2
        out = jnp.maximum(y[:bt] + y[bt:], 0.0)                   # avg + max, final ReLU
        out = out.astype(o_ref.dtype)
        # o_ref block is (b_tile, 1, C); store row by row (cheap, tail-only).
        for r in range(bt):
            o_ref[r] = out[r:r + 1, :]


def _vmem_budget():
    """(x-stream data budget, scoped vmem limit) from the chip's real VMEM size."""
    try:
        cap = pltpu.get_tpu_info().vmem_capacity_bytes
    except Exception:
        cap = 64 << 20                       # conservative fallback (v7x per-core)
    limit = min((cap * 3) // 4, 96 << 20)    # v5e/v6e -> 96 MiB, v7x -> 48 MiB
    return (limit * 2) // 3, limit


def _hw_cap(b_tile, c, hw, budget_bytes, n_buf=2):
    """Largest 128-multiple hw tile that fits the data budget for this b_tile."""
    per_lane = 4 * n_buf * b_tile * c                    # pipelined x buffers (f32)
    fixed = 2 * b_tile * c * min(_ACC_W, hw) * 4         # 128-wide sum/max accumulators
    avail = max(budget_bytes - fixed, 0)
    return max(128, min((avail // max(per_lane, 1)) // 128 * 128, _MAX_HW_TILE))


def _pick_b_tile(b, c, hw, budget_bytes):
    # Output layout (B, 1, C) frees b_tile from the 8-sublane rule, so any
    # divisor of B is legal.
    cands = [d for d in range(min(b, 8), 0, -1) if b % d == 0]
    # v7x has 2 TensorCores: keep >= 2 blocks on the "parallel" batch axis.
    ok = [bt for bt in cands if b < 2 or b // bt >= 2] or cands
    hw_goal = min(512, hw if hw < 128 else (hw // 128) * 128)
    for bt in ok:                     # largest b_tile whose hw cap meets the goal
        if _hw_cap(bt, c, hw, budget_bytes) >= hw_goal:
            return bt
    return ok[-1]                     # smallest candidate -> biggest hw cap


def _pick_hw_tile(hw, cap):
    if hw < 128:
        return hw                     # single full-extent block
    hw_floor = (hw // 128) * 128
    if hw_floor <= cap:
        return hw if hw % 128 == 0 else hw_floor      # (masked tail if not exact)
    # Largest exact 128-multiple divisor <= cap; use it only if within ~2x of
    # cap, otherwise prefer the large masked-tail tile (mask is last-step only).
    best_div = None
    t = 128
    while t <= cap:
        if hw % t == 0:
            best_div = t
        t += 128
    if best_div is not None and 2 * best_div >= cap:
        return best_div
    return cap


def channel_attention(x, w1, b1, w2, b2, *, hw_tile=None):
    """x: (B, C, H, W) f32/bf16. Returns (B, C, 1, 1) float32."""
    B, C, H, W = x.shape
    Cr = w1.shape[1]
    HW = H * W
    x3 = x.reshape(B, C, HW)          # streamed in native dtype (bf16 halves HBM bytes)

    budget, vmem_limit = _vmem_budget()
    b_tile = _pick_b_tile(B, C, HW, budget)
    if hw_tile is None:
        hw_tile = _pick_hw_tile(HW, _hw_cap(b_tile, C, HW, budget))
    assert hw_tile % 128 == 0 or hw_tile == HW, \
        "hw_tile must be a multiple of 128 or the full H*W extent"
    acc_w = _ACC_W if hw_tile % _ACC_W == 0 else hw_tile
    needs_mask = (HW % hw_tile) != 0
    n_hw = pl.cdiv(HW, hw_tile)
    grid = (B // b_tile, n_hw)

    # Deepen the x pipeline to 3 buffers only when it is free (enough VMEM
    # headroom) and there are enough hw steps for it to matter.
    Buffered = getattr(pl, "Buffered", None)
    xb = x3.dtype.itemsize
    used = 2 * b_tile * C * hw_tile * xb + 2 * b_tile * C * acc_w * 4
    extra = b_tile * C * hw_tile * xb
    x_block = (b_tile, C, hw_tile)
    x_index = lambda b, k: (b, 0, k)
    x_spec = pl.BlockSpec(x_block, x_index)
    if Buffered is not None and n_hw >= 3 and used + extra <= budget:
        try:
            x_spec = pl.BlockSpec(x_block, x_index, pipeline_mode=Buffered(3))
        except TypeError:
            x_spec = pl.BlockSpec(x_block, x_index)

    kernel = functools.partial(
        _channel_attention_kernel,
        hw_total=HW, hw_tile=hw_tile, acc_w=acc_w, needs_mask=needs_mask)

    cost = pl.CostEstimate(
        flops=2 * B * C * HW + 8 * B * C * Cr + 4 * B * C,
        transcendentals=0,
        bytes_accessed=x3.size * xb + 4 * (2 * C * Cr + C + Cr + B * C),
    )

    out = pl.pallas_call(
        kernel,
        out_shape=jax.ShapeDtypeStruct((B, 1, C), jnp.float32),
        grid_spec=pltpu.PrefetchScalarGridSpec(
            num_scalar_prefetch=0,
            grid=grid,
            in_specs=[
                x_spec,
                pl.BlockSpec((C, Cr), lambda b, k: (0, 0)),
                pl.BlockSpec((1, Cr), lambda b, k: (0, 0)),
                pl.BlockSpec((Cr, C), lambda b, k: (0, 0)),
                pl.BlockSpec((1, C), lambda b, k: (0, 0)),
            ],
            out_specs=pl.BlockSpec((b_tile, 1, C), lambda b, k: (b, 0, 0)),
            scratch_shapes=[
                pltpu.VMEM((b_tile, C, acc_w), jnp.float32),   # running sum
                pltpu.VMEM((b_tile, C, acc_w), jnp.float32),   # running max
            ],
        ),
        compiler_params=pltpu.CompilerParams(
            dimension_semantics=("parallel", "arbitrary"),
            vmem_limit_bytes=vmem_limit,
        ),
        cost_estimate=cost,
    )(x3, w1, b1, w2, b2)

    return out.reshape(B, C, 1, 1)


def init_params(key, in_channels, reduction_ratio=16):
    """nn.Linear-style init; weights stored as (in_features, out_features)."""
    cr = in_channels // reduction_ratio
    k1, k2, k3, k4 = jax.random.split(key, 4)
    bound1 = 1.0 / jnp.sqrt(in_channels)
    bound2 = 1.0 / jnp.sqrt(cr)
    w1 = jax.random.uniform(k1, (in_channels, cr), jnp.float32, -bound1, bound1)
    b1 = jax.random.uniform(k2, (1, cr), jnp.float32, -bound1, bound1)
    w2 = jax.random.uniform(k3, (cr, in_channels), jnp.float32, -bound2, bound2)
    b2 = jax.random.uniform(k4, (1, in_channels), jnp.float32, -bound2, bound2)
    return w1, b1, w2, b2


def reference(x, w1, b1, w2, b2):
    B, C, H, W = x.shape
    xf = x.astype(jnp.float32)
    avg = xf.mean(axis=(2, 3))
    mxx = xf.max(axis=(2, 3))

    def mlp(v):
        h = jnp.maximum(v @ w1 + b1, 0.0)
        return h @ w2 + b2

    out = jnp.maximum(mlp(avg) + mlp(mxx), 0.0)
    return out.reshape(B, C, 1, 1)


if __name__ == "__main__":
    key = jax.random.PRNGKey(0)
    kx, kp = jax.random.split(key)

    B, C, H, W = 2, 32, 16, 16
    x = jax.random.normal(kx, (B, C, H, W), jnp.float32)
    w1, b1, w2, b2 = init_params(kp, C, reduction_ratio=16)
    ref = reference(x, w1, b1, w2, b2)

    # 1) Auto-tiled path (single HW block at this size).
    out = jax.block_until_ready(channel_attention(x, w1, b1, w2, b2))
    assert out.shape == (B, C, 1, 1)
    assert jnp.allclose(out, ref, atol=1e-4, rtol=1e-4)

    # 2) Multi-step streaming path (forced hw_tile=128 -> 2 HW steps, 128-wide accs).
    out2 = jax.block_until_ready(channel_attention(x, w1, b1, w2, b2, hw_tile=128))
    assert jnp.allclose(out2, ref, atol=1e-4, rtol=1e-4)

    # 3) Masked-tail path (+ 3-deep x pipeline when supported): H*W=324, 3 steps.
    x_odd = jax.random.normal(kx, (B, C, 18, 18), jnp.float32)
    out3 = jax.block_until_ready(channel_attention(x_odd, w1, b1, w2, b2, hw_tile=128))
    assert jnp.allclose(out3, reference(x_odd, w1, b1, w2, b2), atol=1e-4, rtol=1e-4)

    # 4) Auto tiling on a non-128-multiple HW with b_tile > 1 on the parallel axis.
    B4, C4 = 4, 64
    x4 = jax.random.normal(kx, (B4, C4, 18, 18), jnp.float32)
    w1b, b1b, w2b, b2b = init_params(kp, C4, reduction_ratio=16)
    out4 = jax.block_until_ready(channel_attention(x4, w1b, b1b, w2b, b2b))
    assert jnp.allclose(out4, reference(x4, w1b, b1b, w2b, b2b), atol=1e-4, rtol=1e-4)

    # 5) bf16 activations stream at half the HBM bytes; math stays f32 in-kernel.
    x_bf = x.astype(jnp.bfloat16)
    out5 = jax.block_until_ready(channel_attention(x_bf, w1, b1, w2, b2))
    assert jnp.allclose(out5, reference(x_bf, w1, b1, w2, b2), atol=1e-3, rtol=1e-3)

    print("KERNEL_OK")
</pallas_src>

<mosaic_0001>
module attributes {stable_mosaic.version = 11 : i64} {
  func.func @_channel_attention_kernel(%arg0: i32, %arg1: i32, %arg2: memref<1x32x256xf32, #tpu.memory_space<vmem>>, %arg3: memref<32x2xf32, #tpu.memory_space<vmem>>, %arg4: memref<1x2xf32, #tpu.memory_space<vmem>>, %arg5: memref<2x32xf32, #tpu.memory_space<vmem>>, %arg6: memref<1x32xf32, #tpu.memory_space<vmem>>, %arg7: memref<1x1x32xf32, #tpu.memory_space<vmem>>, %arg8: memref<1x32x128xf32, #tpu.memory_space<vmem>>, %arg9: memref<1x32x128xf32, #tpu.memory_space<vmem>>) attributes {dimension_semantics = [#tpu.dimension_semantics<parallel>, #tpu.dimension_semantics<arbitrary>], iteration_bounds = array<i64: 2, 1>, scalar_prefetch = 0 : i64, scratch_operands = 2 : i64, tpu.core_type = #tpu.core_type<tc>, window_params = [{transform_indices = @transform_0, window_bounds = array<i64: 1, 32, 256>}, {pipeline_mode = #tpu.pipeline_mode<synchronous>, transform_indices = @transform_1, window_bounds = array<i64: 32, 2>}, {pipeline_mode = #tpu.pipeline_mode<synchronous>, transform_indices = @transform_2, window_bounds = array<i64: 1, 2>}, {pipeline_mode = #tpu.pipeline_mode<synchronous>, transform_indices = @transform_3, window_bounds = array<i64: 2, 32>}, {pipeline_mode = #tpu.pipeline_mode<synchronous>, transform_indices = @transform_4, window_bounds = array<i64: 1, 32>}, {transform_indices = @transform_5, window_bounds = array<i64: 1, 1, 32>}]} {
    %c0_i32 = arith.constant 0 : i32
    %0 = arith.cmpi eq, %arg1, %c0_i32 : i32
    %1 = arith.extui %0 : i1 to i32
    %c0_i32_0 = arith.constant 0 : i32
    %2 = arith.cmpi ne, %1, %c0_i32_0 : i32
    scf.if %2 {
      %cst = arith.constant 0.000000e+00 : f32
      %20 = vector.broadcast %cst : f32 to vector<1x32x128xf32>
      %c0_31 = arith.constant 0 : index
      %c0_32 = arith.constant 0 : index
      %c0_33 = arith.constant 0 : index
      %21 = vector.load %arg8[%c0_31, %c0_32, %c0_33] : memref<1x32x128xf32, #tpu.memory_space<vmem>>, vector<1x32x128xf32>
      tpu.vector_store %arg8[%c0_31, %c0_32, %c0_33], %20 {strides = array<i32>} : memref<1x32x128xf32, #tpu.memory_space<vmem>>, vector<1x32x128xf32>,
      %cst_34 = arith.constant 0xFF800000 : f32
      %22 = vector.broadcast %cst_34 : f32 to vector<1x32x128xf32>
      %c0_35 = arith.constant 0 : index
      %c0_36 = arith.constant 0 : index
      %c0_37 = arith.constant 0 : index
      %23 = vector.load %arg9[%c0_35, %c0_36, %c0_37] : memref<1x32x128xf32, #tpu.memory_space<vmem>>, vector<1x32x128xf32>
      tpu.vector_store %arg9[%c0_35, %c0_36, %c0_37], %22 {strides = array<i32>} : memref<1x32x128xf32, #tpu.memory_space<vmem>>, vector<1x32x128xf32>,
    } else {
    }
    %c0 = arith.constant 0 : index
    %c0_1 = arith.constant 0 : index
    %c0_2 = arith.constant 0 : index
    %3 = vector.load %arg2[%c0, %c0_1, %c0_2] : memref<1x32x256xf32, #tpu.memory_space<vmem>>, vector<1x32x128xf32>
    %c0_3 = arith.constant 0 : index
    %c0_4 = arith.constant 0 : index
    %c0_5 = arith.constant 0 : index
    %4 = vector.load %arg8[%c0_3, %c0_4, %c0_5] : memref<1x32x128xf32, #tpu.memory_space<vmem>>, vector<1x32x128xf32>
    %5 = arith.addf %4, %3 : vector<1x32x128xf32>
    %c0_6 = arith.constant 0 : index
    %c0_7 = arith.constant 0 : index
    %c0_8 = arith.constant 0 : index
    %6 = vector.load %arg8[%c0_6, %c0_7, %c0_8] : memref<1x32x128xf32, #tpu.memory_space<vmem>>, vector<1x32x128xf32>
    tpu.vector_store %arg8[%c0_6, %c0_7, %c0_8], %5 {strides = array<i32>} : memref<1x32x128xf32, #tpu.memory_space<vmem>>, vector<1x32x128xf32>,
    %c0_9 = arith.constant 0 : index
    %c0_10 = arith.constant 0 : index
    %c0_11 = arith.constant 0 : index
    %7 = vector.load %arg9[%c0_9, %c0_10, %c0_11] : memref<1x32x128xf32, #tpu.memory_space<vmem>>, vector<1x32x128xf32>
    %8 = arith.maximumf %7, %3 : vector<1x32x128xf32>
    %c0_12 = arith.constant 0 : index
    %c0_13 = arith.constant 0 : index
    %c0_14 = arith.constant 0 : index
    %9 = vector.load %arg9[%c0_12, %c0_13, %c0_14] : memref<1x32x128xf32, #tpu.memory_space<vmem>>, vector<1x32x128xf32>
    tpu.vector_store %arg9[%c0_12, %c0_13, %c0_14], %8 {strides = array<i32>} : memref<1x32x128xf32, #tpu.memory_space<vmem>>, vector<1x32x128xf32>,
    %c0_15 = arith.constant 0 : index
    %c0_16 = arith.constant 0 : index
    %c128 = arith.constant 128 : index
    %10 = vector.load %arg2[%c0_15, %c0_16, %c128] : memref<1x32x256xf32, #tpu.memory_space<vmem>>, vector<1x32x128xf32>
    %c0_17 = arith.constant 0 : index
    %c0_18 = arith.constant 0 : index
    %c0_19 = arith.constant 0 : index
    %11 = vector.load %arg8[%c0_17, %c0_18, %c0_19] : memref<1x32x128xf32, #tpu.memory_space<vmem>>, vector<1x32x128xf32>
    %12 = arith.addf %11, %10 : vector<1x32x128xf32>
    %c0_20 = arith.constant 0 : index
    %c0_21 = arith.constant 0 : index
    %c0_22 = arith.constant 0 : index
    %13 = vector.load %arg8[%c0_20, %c0_21, %c0_22] : memref<1x32x128xf32, #tpu.memory_space<vmem>>, vector<1x32x128xf32>
    tpu.vector_store %arg8[%c0_20, %c0_21, %c0_22], %12 {strides = array<i32>} : memref<1x32x128xf32, #tpu.memory_space<vmem>>, vector<1x32x128xf32>,
    %c0_23 = arith.constant 0 : index
    %c0_24 = arith.constant 0 : index
    %c0_25 = arith.constant 0 : index
    %14 = vector.load %arg9[%c0_23, %c0_24, %c0_25] : memref<1x32x128xf32, #tpu.memory_space<vmem>>, vector<1x32x128xf32>
    %15 = arith.maximumf %14, %10 : vector<1x32x128xf32>
    %c0_26 = arith.constant 0 : index
    %c0_27 = arith.constant 0 : index
    %c0_28 = arith.constant 0 : index
    %16 = vector.load %arg9[%c0_26, %c0_27, %c0_28] : memref<1x32x128xf32, #tpu.memory_space<vmem>>, vector<1x32x128xf32>
    tpu.vector_store %arg9[%c0_26, %c0_27, %c0_28], %15 {strides = array<i32>} : memref<1x32x128xf32, #tpu.memory_space<vmem>>, vector<1x32x128xf32>,
    %c0_i32_29 = arith.constant 0 : i32
    %17 = arith.cmpi eq, %arg1, %c0_i32_29 : i32
    %18 = arith.extui %17 : i1 to i32
    %c0_i32_30 = arith.constant 0 : i32
    %19 = arith.cmpi ne, %18, %c0_i32_30 : i32
    scf.if %19 {
      %c0_31 = arith.constant 0 : index
      %c0_32 = arith.constant 0 : index
      %c0_33 = arith.constant 0 : index
      %20 = vector.load %arg8[%c0_31, %c0_32, %c0_33] : memref<1x32x128xf32, #tpu.memory_space<vmem>>, vector<1x32x128xf32>
      %cst = arith.constant dense<0.000000e+00> : vector<1x32xf32>
      %21 = vector.multi_reduction <add>, %20, %cst [2] : vector<1x32x128xf32> to vector<1x32xf32>
      %cst_34 = arith.constant 3.906250e-03 : f32
      %22 = vector.broadcast %cst_34 : f32 to vector<1x32xf32>
      %23 = arith.mulf %21, %22 : vector<1x32xf32>
      %c0_35 = arith.constant 0 : index
      %c0_36 = arith.constant 0 : index
      %c0_37 = arith.constant 0 : index
      %24 = vector.load %arg9[%c0_35, %c0_36, %c0_37] : memref<1x32x128xf32, #tpu.memory_space<vmem>>, vector<1x32x128xf32>
      %cst_38 = arith.constant dense<0xFF800000> : vector<1x32xf32>
      %25 = vector.multi_reduction <maximumf>, %24, %cst_38 [2] : vector<1x32x128xf32> to vector<1x32xf32>
      %c0_39 = arith.constant 0 : index
      %c0_40 = arith.constant 0 : index
      %26 = vector.load %arg3[%c0_39, %c0_40] : memref<32x2xf32, #tpu.memory_space<vmem>>, vector<32x2xf32>
      %c0_41 = arith.constant 0 : index
      %c0_42 = arith.constant 0 : index
      %27 = vector.load %arg5[%c0_41, %c0_42] : memref<2x32xf32, #tpu.memory_space<vmem>>, vector<2x32xf32>
      %c0_43 = arith.constant 0 : index
      %c0_44 = arith.constant 0 : index
      %28 = vector.load %arg4[%c0_43, %c0_44] : memref<1x2xf32, #tpu.memory_space<vmem>>, vector<1x2xf32>
      %c0_45 = arith.constant 0 : index
      %c0_46 = arith.constant 0 : index
      %29 = vector.load %arg6[%c0_45, %c0_46] : memref<1x32xf32, #tpu.memory_space<vmem>>, vector<1x32xf32>
      %30 = tpu.concatenate %23, %25 in 0 : vector<1x32xf32>, vector<1x32xf32> -> vector<2x32xf32>
      %cst_47 = arith.constant dense<0.000000e+00> : vector<2x2xf32>
      %31 = tpu.matmul %30, %26, %cst_47 {dimension_numbers = #tpu.dot_dimension_numbers<[1], [0], [0], [1], [0, 0, 1, 1], [], []>} : vector<2x32xf32>, vector<32x2xf32>, vector<2x2xf32> -> vector<2x2xf32>
      %32 = vector.broadcast %28 : vector<1x2xf32> to vector<2x2xf32>
      %33 = arith.addf %31, %32 : vector<2x2xf32>
      %cst_48 = arith.constant 0.000000e+00 : f32
      %34 = vector.broadcast %cst_48 : f32 to vector<2x2xf32>
      %35 = arith.maximumf %33, %34 : vector<2x2xf32>
      %cst_49 = arith.constant dense<0.000000e+00> : vector<2x32xf32>
      %36 = tpu.matmul %35, %27, %cst_49 {dimension_numbers = #tpu.dot_dimension_numbers<[1], [0], [0], [1], [0, 0, 1, 1], [], []>} : vector<2x2xf32>, vector<2x32xf32>, vector<2x32xf32> -> vector<2x32xf32>
      %37 = vector.broadcast %29 : vector<1x32xf32> to vector<2x32xf32>
      %38 = arith.addf %36, %37 : vector<2x32xf32>
      %39 = vector.extract_strided_slice %38 {offsets = [0, 0], sizes = [1, 32], strides = [1, 1]} : vector<2x32xf32> to vector<1x32xf32>
      %40 = vector.extract_strided_slice %38 {offsets = [1, 0], sizes = [1, 32], strides = [1, 1]} : vector<2x32xf32> to vector<1x32xf32>
      %41 = arith.addf %39, %40 : vector<1x32xf32>
      %cst_50 = arith.constant 0.000000e+00 : f32
      %42 = vector.broadcast %cst_50 : f32 to vector<1x32xf32>
      %43 = arith.maximumf %41, %42 : vector<1x32xf32>
      %c0_51 = arith.constant 0 : index
      %c0_52 = arith.constant 0 : index
      %c0_53 = arith.constant 0 : index
      %44 = vector.load %arg7[%c0_51, %c0_52, %c0_53] : memref<1x1x32xf32, #tpu.memory_space<vmem>>, vector<1x1x32xf32>
      %45 = vector.shape_cast %44 : vector<1x1x32xf32> to vector<1x32xf32>
      %46 = vector.shape_cast %43 : vector<1x32xf32> to vector<1x1x32xf32>
      tpu.vector_store %arg7[%c0_51, %c0_52, %c0_53], %46 {strides = array<i32>} : memref<1x1x32xf32, #tpu.memory_space<vmem>>, vector<1x1x32xf32>,
    } else {
    }
    return
  }
  func.func @transform_0(%arg0: i32, %arg1: i32) -> (i32, i32, i32) {
    %c0_i32 = arith.constant 0 : i32
    %c0_i32_0 = arith.constant 0 : i32
    return %arg0, %c0_i32, %arg1 : i32, i32, i32
  }
  func.func @transform_1(%arg0: i32, %arg1: i32) -> (i32, i32) {
    %c0_i32 = arith.constant 0 : i32
    %c0_i32_0 = arith.constant 0 : i32
    %c0_i32_1 = arith.constant 0 : i32
    return %c0_i32, %c0_i32_0 : i32, i32
  }
  func.func @transform_2(%arg0: i32, %arg1: i32) -> (i32, i32) {
    %c0_i32 = arith.constant 0 : i32
    %c0_i32_0 = arith.constant 0 : i32
    %c0_i32_1 = arith.constant 0 : i32
    return %c0_i32, %c0_i32_0 : i32, i32
  }
  func.func @transform_3(%arg0: i32, %arg1: i32) -> (i32, i32) {
    %c0_i32 = arith.constant 0 : i32
    %c0_i32_0 = arith.constant 0 : i32
    %c0_i32_1 = arith.constant 0 : i32
    return %c0_i32, %c0_i32_0 : i32, i32
  }
  func.func @transform_4(%arg0: i32, %arg1: i32) -> (i32, i32) {
    %c0_i32 = arith.constant 0 : i32
    %c0_i32_0 = arith.constant 0 : i32
    %c0_i32_1 = arith.constant 0 : i32
    return %c0_i32, %c0_i32_0 : i32, i32
  }
  func.func @transform_5(%arg0: i32, %arg1: i32) -> (i32, i32, i32) {
    %c0_i32 = arith.constant 0 : i32
    %c0_i32_0 = arith.constant 0 : i32
    %c0_i32_1 = arith.constant 0 : i32
    return %arg0, %c0_i32, %c0_i32_0 : i32, i32, i32
  }
}

</mosaic_0001>

<llo_original>
// kernel: tpu_custom_call.1
$region0: #{tpu_custom_call.1}
  #allocation0 [shape = 'u32[]', space=smem, size = 0x4, offset = 0x4, fixed_abs, tag = 'smem constant byte address 0x4 - core index']
  #allocation1 [shape = 'u32[144,128]{1,0:T(1,128)}', space=vmem, size = 0x12000, scoped, tag = 'internal scratch']
  #allocation2 [shape = 'f32[1,32,128]{2,1,0:T(8,128)}', space=vmem, size = 0x4000, scoped, tag = 'scratch operand']
  #allocation3 [shape = 'f32[1,32,128]{2,1,0:T(8,128)}', space=vmem, size = 0x4000, scoped, tag = 'scratch operand']
  %s0 = inlined_call_operand.hbm [shape: f32[2,32,256], index: 0, kind: input, shape index: {}]
  %s1 = inlined_call_operand.vmem [shape: f32[32,2], index: 1, kind: input, shape index: {}]
  %s2 = inlined_call_operand.vmem [shape: f32[1,2], index: 2, kind: input, shape index: {}]
  %s3 = inlined_call_operand.vmem [shape: f32[2,32], index: 3, kind: input, shape index: {}]
  %s4 = inlined_call_operand.vmem [shape: f32[1,32], index: 4, kind: input, shape index: {}]
  %s5 = inlined_call_operand.hbm [shape: f32[2,1,32], index: 5, kind: output, shape index: {}]
  %s6 = sld [smem:[#allocation0]]
  $region65: #{tpu_custom_call.1} parent=0
    _
  %s8 = ssub.s32 1, %s6
  %s9 = scalar_select 0, %s8, %s6
  $region1: #{tpu_custom_call.1} parent=0
    #allocation4 [shape = 'u8[65536]{0}', space=vmem, size = 0x10000, scoped, tag = 'input window, operand 0']
    #allocation5 [shape = 's32[2]{0}', space=sflag, size = 0x8, scoped, tag = 'scoped memory for tpu_custom_call.1']
    #allocation6 [shape = 's32[2]{0}', space=sflag, size = 0x8, scoped, tag = 'scoped memory for tpu_custom_call.1']
    #allocation7 [shape = 'u8[1024]{0}', space=vmem, size = 0x400, scoped, tag = 'output window, operand 0']
    %10 = vsyncpa [#allocation5], 0
    %s11 = scalar_lea.sflag [#allocation5], 1
    %12 = vsyncpa %s11, 0
    %13 = vsyncpa [#allocation6], 0
    %s14 = scalar_lea.sflag [#allocation6], 1
    %15 = vsyncpa %s14, 0
    loop: start=0, step=1, limit=4
    $region2: #{tpu_custom_call.1} parent=1 // loop_pre_header
      _
    $region3: #{tpu_custom_call.1} parent=1 // loop_header
      %s17 = sphi 0, %s21
      %p18 = scmp.ge.s32.totalorder %s17, 4
      %s24 = sphi 0, %s36
      %s25 = sphi 0, %s32
      %s26 = sphi 0, %s24
      %s27 = sphi 0, %s25
      %s28 = sphi 0, %s26
      %s29 = sphi 0, %s27
      %s41 = sphi 0, %s43
      %s44 = sphi 0, %s41
      %s45 = sphi 0, %s44
      %s61 = sphi 0, %s45
      %s65 = sphi 0, %s65
      %s67 = sphi 0, %s65
      %s68 = sphi 0, %s67
      %s82 = sphi 0, %s68
      %s86 = sphi 0, %s86
      %s88 = sphi 0, %s86
      %s89 = sphi 0, %s88
      %s103 = sphi 0, %s89
      %s107 = sphi 0, %s107
      %s109 = sphi 0, %s107
      %s110 = sphi 0, %s109
      %s124 = sphi 0, %s110
      %s128 = sphi 0, %s128
      %s130 = sphi 0, %s128
      %s131 = sphi 0, %s130
      %s145 = sphi 0, %s131
      %s151 = sphi 0, %s153
      %s154 = sphi 0, %s151
      %s155 = sphi 0, %s154
      %s171 = sphi 0, %s155
    $region4: #{tpu_custom_call.1} parent=1 // loop_header_branch
      %20 = sbr.rel (%p18) target = $region8
    $region5: #{tpu_custom_call.1} parent=1 // loop_body
      %s22 = ssub.s32 %s17, 1
      %s23 = ssub.s32 %s17, 2
      %s30 = sadd.s32 1, %s25
      %p31 = scmp.ge.s32.totalorder %s30, 1
      %s32 = scalar_select %p31, 0, %s30
      %s33 = sadd.s32 1, %s24
      %s34 = scalar_select %p31, %s33, %s24
      %p35 = scmp.ge.s32.totalorder %s34, 2
      %s36 = scalar_select %p35, 0, %s34
      %s37 = ssub.s32 %s24, %s36
      %s38 = ssub.s32 %s25, %s32
      %s39 = sor.u32 %s37, %s38
      %p40 = scmp.eq.s32.totalorder %s39, 0
      %s42 = sadd.s32 %s41, 1
      %s43 = scalar_select %p40, %s41, %s42
      %p46 = pneg %p40
      %p47 = scmp.eq.s32.totalorder %s17, 1
      %p48 = por %p46, %p47
      %p49 = scmp.ne.s32.totalorder %s41, %s44
      %p50 = scmp.eq.s32.totalorder %s17, 0
      %p51 = por %p49, %p50
      %p52 = scmp.ne.s32.totalorder %s41, %s44
      %p53 = scmp.eq.s32.totalorder %s22, 1
      %p54 = por %p52, %p53
      %p55 = scmp.ne.s32.totalorder %s44, %s45
      %p56 = scmp.eq.s32.totalorder %s22, 0
      %p57 = por %p55, %p56
      %p58 = scmp.ne.s32.totalorder %s44, %s45
      %p59 = scmp.eq.s32.totalorder %s23, 1
      %p60 = por %p58, %p59
      %p62 = scmp.ne.s32.totalorder %s45, %s61
      %p63 = scmp.eq.s32.totalorder %s23, 0
      %p64 = por %p62, %p63
      %s66 = sadd.s32 %s65, 1
      %p69 = scmp.eq.s32.totalorder %s17, 1
      %p70 = scmp.ne.s32.totalorder %s65, %s67
      %p71 = scmp.eq.s32.totalorder %s17, 0
      %p72 = por %p70, %p71
      %p73 = scmp.ne.s32.totalorder %s65, %s67
      %p74 = scmp.eq.s32.totalorder %s22, 1
      %p75 = por %p73, %p74
      %p76 = scmp.ne.s32.totalorder %s67, %s68
      %p77 = scmp.eq.s32.totalorder %s22, 0
      %p78 = por %p76, %p77
      %p79 = scmp.ne.s32.totalorder %s67, %s68
      %p80 = scmp.eq.s32.totalorder %s23, 1
      %p81 = por %p79, %p80
      %p83 = scmp.ne.s32.totalorder %s68, %s82
      %p84 = scmp.eq.s32.totalorder %s23, 0
      %p85 = por %p83, %p84
      %s87 = sadd.s32 %s86, 1
      %p90 = scmp.eq.s32.totalorder %s17, 1
      %p91 = scmp.ne.s32.totalorder %s86, %s88
      %p92 = scmp.eq.s32.totalorder %s17, 0
      %p93 = por %p91, %p92
      %p94 = scmp.ne.s32.totalorder %s86, %s88
      %p95 = scmp.eq.s32.totalorder %s22, 1
      %p96 = por %p94, %p95
      %p97 = scmp.ne.s32.totalorder %s88, %s89
      %p98 = scmp.eq.s32.totalorder %s22, 0
      %p99 = por %p97, %p98
      %p100 = scmp.ne.s32.totalorder %s88, %s89
      %p101 = scmp.eq.s32.totalorder %s23, 1
      %p102 = por %p100, %p101
      %p104 = scmp.ne.s32.totalorder %s89, %s103
      %p105 = scmp.eq.s32.totalorder %s23, 0
      %p106 = por %p104, %p105
      %s108 = sadd.s32 %s107, 1
      %p111 = scmp.eq.s32.totalorder %s17, 1
      %p112 = scmp.ne.s32.totalorder %s107, %s109
      %p113 = scmp.eq.s32.totalorder %s17, 0
      %p114 = por %p112, %p113
      %p115 = scmp.ne.s32.totalorder %s107, %s109
      %p116 = scmp.eq.s32.totalorder %s22, 1
      %p117 = por %p115, %p116
      %p118 = scmp.ne.s32.totalorder %s109, %s110
      %p119 = scmp.eq.s32.totalorder %s22, 0
      %p120 = por %p118, %p119
      %p121 = scmp.ne.s32.totalorder %s109, %s110
      %p122 = scmp.eq.s32.totalorder %s23, 1
      %p123 = por %p121, %p122
      %p125 = scmp.ne.s32.totalorder %s110, %s124
      %p126 = scmp.eq.s32.totalorder %s23, 0
      %p127 = por %p125, %p126
      %s129 = sadd.s32 %s128, 1
      %p132 = scmp.eq.s32.totalorder %s17, 1
      %p133 = scmp.ne.s32.totalorder %s128, %s130
      %p134 = scmp.eq.s32.totalorder %s17, 0
      %p135 = por %p133, %p134
      %p136 = scmp.ne.s32.totalorder %s128, %s130
      %p137 = scmp.eq.s32.totalorder %s22, 1
      %p138 = por %p136, %p137
      %p139 = scmp.ne.s32.totalorder %s130, %s131
      %p140 = scmp.eq.s32.totalorder %s22, 0
      %p141 = por %p139, %p140
      %p142 = scmp.ne.s32.totalorder %s130, %s131
      %p143 = scmp.eq.s32.totalorder %s23, 1
      %p144 = por %p142, %p143
      %p146 = scmp.ne.s32.totalorder %s131, %s145
      %p147 = scmp.eq.s32.totalorder %s23, 0
      %p148 = por %p146, %p147
      %s149 = ssub.s32 %s24, %s36
      %p150 = scmp.eq.s32.totalorder %s149, 0
      %s152 = sadd.s32 %s151, 1
      %s153 = scalar_select %p150, %s151, %s152
      %p156 = pneg %p150
      %p157 = scmp.eq.s32.totalorder %s17, 1
      %p158 = por %p156, %p157
      %p159 = scmp.ne.s32.totalorder %s151, %s154
      %p160 = scmp.eq.s32.totalorder %s17, 0
      %p161 = por %p159, %p160
      %p162 = scmp.ne.s32.totalorder %s151, %s154
      %p163 = scmp.eq.s32.totalorder %s22, 1
      %p164 = por %p162, %p163
      %p165 = scmp.ne.s32.totalorder %s154, %s155
      %p166 = scmp.eq.s32.totalorder %s22, 0
      %p167 = por %p165, %p166
      %p168 = scmp.ne.s32.totalorder %s154, %s155
      %p169 = scmp.eq.s32.totalorder %s23, 1
      %p170 = por %p168, %p169
      %p172 = scmp.ne.s32.totalorder %s155, %s171
      %p173 = scmp.eq.s32.totalorder %s23, 0
      %p174 = por %p172, %p173
      %p175 = scmp.le.s32.totalorder 1, %s17
      %p176 = scmp.lt.s32.totalorder %s17, 3
      %p177 = pnand %p175, %p176
      %p178 = pneg %p177
      // Predicated region
      $region9: #{tpu_custom_call.1} parent=5 // pred_check
        _
      $region10: #{tpu_custom_call.1} parent=5 // pred_check_branch
        %180 = sbr.rel (%p177) target = $region12
      $region11: #{tpu_custom_call.1} parent=5 // pred_region
        %s181 = ssub.s32 %s17, 1
        // Predicated region
        $region13: #{tpu_custom_call.1} parent=11 // pred_check
          %p182 = pneg %p78
        $region14: #{tpu_custom_call.1} parent=11 // pred_check_branch
          %184 = sbr.rel (%p182) target = $region16
        $region15: #{tpu_custom_call.1} parent=11 // pred_region
          _
        $region16: #{tpu_custom_call.1} parent=11 // pred_fallthru
          _
        // Predicated region
        $region17: #{tpu_custom_call.1} parent=11 // pred_check
          %p185 = pneg %p99
        $region18: #{tpu_custom_call.1} parent=11 // pred_check_branch
          %187 = sbr.rel (%p185) target = $region20
        $region19: #{tpu_custom_call.1} parent=11 // pred_region
          _
        $region20: #{tpu_custom_call.1} parent=11 // pred_fallthru
          _
        // Predicated region
        $region21: #{tpu_custom_call.1} parent=11 // pred_check
          %p188 = pneg %p120
        $region22: #{tpu_custom_call.1} parent=11 // pred_check_branch
          %190 = sbr.rel (%p188) target = $region24
        $region23: #{tpu_custom_call.1} parent=11 // pred_region
          _
        $region24: #{tpu_custom_call.1} parent=11 // pred_fallthru
          _
        // Predicated region
        $region25: #{tpu_custom_call.1} parent=11 // pred_check
          %p191 = pneg %p141
        $region26: #{tpu_custom_call.1} parent=11 // pred_check_branch
          %193 = sbr.rel (%p191) target = $region28
        $region27: #{tpu_custom_call.1} parent=11 // pred_region
          _
        $region28: #{tpu_custom_call.1} parent=11 // pred_fallthru
          _
      $region12: #{tpu_custom_call.1} parent=5 // pred_fallthru
        _
      %p194 = scmp.lt.s32.totalorder %s17, 2
      // Predicated region
      $region29: #{tpu_custom_call.1} parent=5 // pred_check
        %p195 = pneg %p194
      $region30: #{tpu_custom_call.1} parent=5 // pred_check_branch
        %197 = sbr.rel (%p195) target = $region32
      $region31: #{tpu_custom_call.1} parent=5 // pred_region
        // Predicated region
        $region33: #{tpu_custom_call.1} parent=31 // pred_check
          %p198 = pneg %p51
        $region34: #{tpu_custom_call.1} parent=31 // pred_check_branch
          %200 = sbr.rel (%p198) target = $region36
        $region35: #{tpu_custom_call.1} parent=31 // pred_region
          %s201 = sand.u32 %s41, 1
          %s202 = scalar_lea.sflag [#allocation5], %s201
          %s203 = sand.u32 %s41, 1
          %s204 = smul.addr %s203, 64
          %s205 = scalar_lea.vmem [#allocation4], %s204
          %s206 = smul.u32 2, %s25
          %s208 = ssub.s32 1024, 1024
          %209 = vsyncadd %s202, %s208
          %s210 = smul.addr %s24, 8
          %s211 = sadd.s32 %s206, %s210
          %s212 = smul.addr %s211, 128
          %s213 = scalar_lea.hbm %s0, %s212
          %s214 = sshll.u32 %s205, 4
          %s215 = int_to_ptr.vmem [resolvable:$true] %s214
          %220 = dma.hbm_to_vmem [thread:$0]  %s213, 1024, %s215, %s202, 256, 256, 16
        $region36: #{tpu_custom_call.1} parent=31 // pred_fallthru
          _
      $region32: #{tpu_custom_call.1} parent=5 // pred_fallthru
        _
      %p221 = scmp.le.s32.totalorder 1, %s17
      %p222 = scmp.lt.s32.totalorder %s17, 3
      %p223 = pnand %p221, %p222
      %p224 = pneg %p223
      // Predicated region
      $region37: #{tpu_custom_call.1} parent=5 // pred_check
        _
      $region38: #{tpu_custom_call.1} parent=5 // pred_check_branch
        %226 = sbr.rel (%p223) target = $region40
      $region39: #{tpu_custom_call.1} parent=5 // pred_region
        %s227 = ssub.s32 %s17, 1
        %s228 = sand.u32 %s44, 1
        %s229 = scalar_lea.sflag [#allocation5], %s228
        %s230 = sand.u32 %s44, 1
        %s231 = smul.addr %s230, 64
        %s232 = scalar_lea.vmem [#allocation4], %s231
        // Predicated region
        $region41: #{tpu_custom_call.1} parent=39 // pred_check
          %p233 = pneg %p57
        $region42: #{tpu_custom_call.1} parent=39 // pred_check_branch
          %235 = sbr.rel (%p233) target = $region44
        $region43: #{tpu_custom_call.1} parent=39 // pred_region
          %236 = dma.done %s229, 1024
        $region44: #{tpu_custom_call.1} parent=39 // pred_fallthru
          _
        %s237 = sand.u32 %s44, 1
        %s238 = scalar_lea.sflag [#allocation5], %s237
        %s239 = sand.u32 %s44, 1
        %s240 = smul.addr %s239, 64
        %s241 = scalar_lea.vmem [#allocation4], %s240
        %p242 = pneg %p57
        %p243 = pneg %p54
        %p244 = pneg %p78
        %p245 = pneg %p75
        %p246 = pneg %p99
        %p247 = pneg %p96
        %p248 = pneg %p120
        %p249 = pneg %p117
        %p250 = pneg %p141
        %p251 = pneg %p138
        %p252 = pneg %p167
        %p253 = pneg %p164
        %s254 = sand.u32 %s154, 1
        %s255 = scalar_lea.sflag [#allocation6], %s254
        %s256 = sand.u32 %s154, 1
        %s257 = scalar_lea.vmem [#allocation7], %s256
        %s258 = smul.u32 2, %s27
        %p259 = scmp.eq.s32.totalorder %s27, 0
        // Predicated region
        $region45: #{tpu_custom_call.1} parent=39 // pred_check
          %p260 = pneg %p259
        $region46: #{tpu_custom_call.1} parent=39 // pred_check_branch
          %262 = sbr.rel (%p260) target = $region48
        $region47: #{tpu_custom_call.1} parent=39 // pred_region
          %263 = vst [vmem:[#allocation2] sm:$0xff] 0.0
          %264 = vst [vmem:[#allocation2 + $0x8] sm:$0xff] 0.0
          %265 = vst [vmem:[#allocation2 + $0x10] sm:$0xff] 0.0
          %266 = vst [vmem:[#allocation2 + $0x18] sm:$0xff] 0.0
          %267 = vst [vmem:[#allocation3] sm:$0xff] -inf
          %268 = vst [vmem:[#allocation3 + $0x8] sm:$0xff] -inf
          %269 = vst [vmem:[#allocation3 + $0x10] sm:$0xff] -inf
          %270 = vst [vmem:[#allocation3 + $0x18] sm:$0xff] -inf
        $region48: #{tpu_custom_call.1} parent=39 // pred_fallthru
          _
        %v271 = vld [vmem:[%s232] sm:$0xff]
        %v272 = vld [vmem:[%s232 + $0x10] sm:$0xff]
        %v273 = vld [vmem:[%s232 + $0x20] sm:$0xff]
        %v274 = vld [vmem:[%s232 + $0x30] sm:$0xff]
        %v275 = vld [vmem:[#allocation2] sm:$0xff]
        %v276 = vld [vmem:[#allocation2 + $0x8] sm:$0xff]
        %v277 = vld [vmem:[#allocation2 + $0x10] sm:$0xff]
        %v278 = vld [vmem:[#allocation2 + $0x18] sm:$0xff]
        %v279 = vadd.f32 %v275, %v271
        %v280 = vadd.f32 %v276, %v272
        %v281 = vadd.f32 %v277, %v273
        %v282 = vadd.f32 %v278, %v274
        %283 = vst [vmem:[#allocation2] sm:$0xff] %v279
        %284 = vst [vmem:[#allocation2 + $0x8] sm:$0xff] %v280
        %285 = vst [vmem:[#allocation2 + $0x10] sm:$0xff] %v281
        %286 = vst [vmem:[#allocation2 + $0x18] sm:$0xff] %v282
        %v287 = vld [vmem:[#allocation3] sm:$0xff]
        %v288 = vld [vmem:[#allocation3 + $0x8] sm:$0xff]
        %v289 = vld [vmem:[#allocation3 + $0x10] sm:$0xff]
        %v290 = vld [vmem:[#allocation3 + $0x18] sm:$0xff]
        %v291 = vmax.f32 %v287, %v271
        %v292 = vmax.f32 %v288, %v272
        %v293 = vmax.f32 %v289, %v273
        %v294 = vmax.f32 %v290, %v274
        %295 = vst [vmem:[#allocation3] sm:$0xff] %v291
        %296 = vst [vmem:[#allocation3 + $0x8] sm:$0xff] %v292
        %297 = vst [vmem:[#allocation3 + $0x10] sm:$0xff] %v293
        %298 = vst [vmem:[#allocation3 + $0x18] sm:$0xff] %v294
        %v299 = vld [vmem:[%s232 + $0x8] sm:$0xff]
        %v300 = vld [vmem:[%s232 + $0x18] sm:$0xff]
        %v301 = vld [vmem:[%s232 + $0x28] sm:$0xff]
        %v302 = vld [vmem:[%s232 + $0x38] sm:$0xff]
        %v303 = vld [vmem:[#allocation2] sm:$0xff]
        %v304 = vld [vmem:[#allocation2 + $0x8] sm:$0xff]
        %v305 = vld [vmem:[#allocation2 + $0x10] sm:$0xff]
        %v306 = vld [vmem:[#allocation2 + $0x18] sm:$0xff]
        %v307 = vadd.f32 %v303, %v299
        %v308 = vadd.f32 %v304, %v300
        %v309 = vadd.f32 %v305, %v301
        %v310 = vadd.f32 %v306, %v302
        %311 = vst [vmem:[#allocation2] sm:$0xff] %v307
        %312 = vst [vmem:[#allocation2 + $0x8] sm:$0xff] %v308
        %313 = vst [vmem:[#allocation2 + $0x10] sm:$0xff] %v309
        %314 = vst [vmem:[#allocation2 + $0x18] sm:$0xff] %v310
        %v315 = vld [vmem:[#allocation3] sm:$0xff]
        %v316 = vld [vmem:[#allocation3 + $0x8] sm:$0xff]
        %v317 = vld [vmem:[#allocation3 + $0x10] sm:$0xff]
        %v318 = vld [vmem:[#allocation3 + $0x18] sm:$0xff]
        %v319 = vmax.f32 %v315, %v299
        %v320 = vmax.f32 %v316, %v300
        %v321 = vmax.f32 %v317, %v301
        %v322 = vmax.f32 %v318, %v302
        %323 = vst [vmem:[#allocation3] sm:$0xff] %v319
        %324 = vst [vmem:[#allocation3 + $0x8] sm:$0xff] %v320
        %325 = vst [vmem:[#allocation3 + $0x10] sm:$0xff] %v321
        %326 = vst [vmem:[#allocation3 + $0x18] sm:$0xff] %v322
        // Predicated region
        $region49: #{tpu_custom_call.1} parent=39 // pred_check
          %p327 = pneg %p259
        $region50: #{tpu_custom_call.1} parent=39 // pred_check_branch
          %329 = sbr.rel (%p327) target = $region52
        $region51: #{tpu_custom_call.1} parent=39 // pred_region
          %v330 = vld [vmem:[#allocation2] sm:$0xff]
          %v331 = vld [vmem:[#allocation2 + $0x8] sm:$0xff]
          %v332 = vld [vmem:[#allocation2 + $0x10] sm:$0xff]
          %v333 = vld [vmem:[#allocation2 + $0x18] sm:$0xff]
          %334 = vadd.xlane.f32.xlu0 %v330
          %v335 = vpop.xlane.xlu0 %334
          %336 = vadd.xlane.f32.xlu0 %v331
          %v337 = vpop.xlane.xlu0 %336
          %338 = vadd.xlane.f32.xlu0 %v332
          %v339 = vpop.xlane.xlu0 %338
          %340 = vadd.xlane.f32.xlu0 %v333
          %v341 = vpop.xlane.xlu0 %340
          %v342 = vmul.f32 %v335, 0.00390625
          %v343 = vmul.f32 %v337, 0.00390625
          %v344 = vmul.f32 %v339, 0.00390625
          %v345 = vmul.f32 %v341, 0.00390625
          %v346 = vld [vmem:[#allocation3] sm:$0xff]
          %v347 = vld [vmem:[#allocation3 + $0x8] sm:$0xff]
          %v348 = vld [vmem:[#allocation3 + $0x10] sm:$0xff]
          %v349 = vld [vmem:[#allocation3 + $0x18] sm:$0xff]
          %350 = vmax.xlane.f32.xlu0 %v346
          %v351 = vpop.xlane.xlu0 %350
          %352 = vmax.xlane.f32.xlu0 %v347
          %v353 = vpop.xlane.xlu0 %352
          %354 = vmax.xlane.f32.xlu0 %v348
          %v355 = vpop.xlane.xlu0 %354
          %356 = vmax.xlane.f32.xlu0 %v349
          %v357 = vpop.xlane.xlu0 %356
          %v358 = vld [vmem:[%s1] sm:$0xff]
          %v359 = vld [vmem:[%s1 + $0x8] sm:$0xff]
          %v360 = vld [vmem:[%s1 + $0x10] sm:$0xff]
          %v361 = vld [vmem:[%s1 + $0x18] sm:$0xff]
          %v362 = vld [vmem:[%s3] sm:$0x3]
          %v363 = vld [vmem:[%s2] sm:$0x1]
          %v364 = vld [vmem:[%s4] sm:$0x1]
          %v369 = vlaneseq
          %v370 = vand.u32 %v369, 127
          %v371 = vlaneseq
          %v372 = vshrl.u32 %v371, 7
          %v373 = vsub.s32 %v370, %v372
          %v374 = vrot.slane %v342, %v373
          %v375 = vadd.s32 %v370, 4294967288
          %v376 = vlaneseq
          %v377 = vshrl.u32 %v376, 7
          %v378 = vsub.s32 %v375, %v377
          %v379 = vrot.slane %v343, %v378
          %vm380 = vcmask 130112
          %v381 = vsel %vm380, %v379, %v374
          %v382 = vadd.s32 %v370, 4294967280
          %v383 = vlaneseq
          %v384 = vshrl.u32 %v383, 7
          %v385 = vsub.s32 %v382, %v384
          %v386 = vrot.slane %v344, %v385
          %vm387 = vcmask 195712
          %v388 = vsel %vm387, %v386, %v381
          %v389 = vadd.s32 %v370, 4294967272
          %v390 = vlaneseq
          %v391 = vshrl.u32 %v390, 7
          %v392 = vsub.s32 %v389, %v391
          %v393 = vrot.slane %v345, %v392
          %vm394 = vcmask 261312
          %v395 = vsel %vm394, %v393, %v388
          %v401 = vlaneseq
          %v402 = vshrl.u32 %v401, 7
          %v403 = vsub.s32 %v370, %v402
          %v404 = vrot.slane %v351, %v403
          %v405 = vlaneseq
          %v406 = vshrl.u32 %v405, 7
          %v407 = vsub.s32 %v375, %v406
          %v408 = vrot.slane %v353, %v407
          %v409 = vsel %vm380, %v408, %v404
          %v410 = vlaneseq
          %v411 = vshrl.u32 %v410, 7
          %v412 = vsub.s32 %v382, %v411
          %v413 = vrot.slane %v355, %v412
          %v414 = vsel %vm387, %v413, %v409
          %v415 = vlaneseq
          %v416 = vshrl.u32 %v415, 7
          %v417 = vsub.s32 %v389, %v416
          %v418 = vrot.slane %v357, %v417
          %v419 = vsel %vm394, %v418, %v414
          %vm421 = vcmask 1040384
          %v422 = vsel %vm421, %v395, %v419
          %v424 = vlaneseq
          %v425 = vshrl.u32 %v424, 7
          %v426 = vsub.s32 0, %v425
          %v427 = vrot.slane %v363, %v426
          %vm429 = vcmask 261120
          %v431 = vsel %vm429, %v422, 0
          %433 = vmatprep.subr.mxu0 0.0
          %434 = vmatpush1.msra.mxu0 0.0
          %435 = vmatprep.subr.mxu0 0.0
          %436 = vmatpush1.msra.mxu0 0.0
          %437 = vmatprep.subr.mxu0 0.0
          %438 = vmatpush1.msra.mxu0 0.0
          %439 = vmatprep.subr.mxu0 0.0
          %440 = vmatpush1.msra.mxu0 0.0
          %441 = vmatprep.subr.mxu0 0.0
          %442 = vmatpush1.msra.mxu0 0.0
          %443 = vmatprep.subr.mxu0 0.0
          %444 = vmatpush1.msra.mxu0 0.0
          %445 = vmatprep.subr.mxu0 0.0
          %446 = vmatpush1.msra.mxu0 0.0
          %447 = vmatprep.subr.mxu0 0.0
          %448 = vmatpush1.msra.mxu0 0.0
          %449 = vmatprep.subr.mxu0 0.0
          %450 = vmatpush1.msra.mxu0 0.0
          %451 = vmatprep.subr.mxu0 0.0
          %452 = vmatpush1.msra.mxu0 0.0
          %453 = vmatprep.subr.mxu0 0.0
          %454 = vmatpush1.msra.mxu0 0.0
          %455 = vmatprep.subr.mxu0 0.0
          %456 = vmatpush1.msra.mxu0 0.0
          %457 = vmatprep.subr.mxu0 0.0
          %458 = vmatpush1.msra.mxu0 %v361
          %459 = vmatprep.subr.mxu0 0.0
          %460 = vmatpush1.msra.mxu0 %v360
          %461 = vmatprep.subr.mxu0 0.0
          %462 = vmatpush1.msra.mxu0 %v359
          %463 = vmatprep.subr.mxu0 0.0
          %464 = vmatpush1.msra.mxu0 %v358
          %465 = vmatprep.subr.mxu0 0.0
          %466 = vmatpush2.msra.mxu0 0.0
          %467 = vmatprep.subr.mxu0 0.0
          %468 = vmatpush2.msra.mxu0 0.0
          %469 = vmatprep.subr.mxu0 0.0
          %470 = vmatpush2.msra.mxu0 0.0
          %471 = vmatprep.subr.mxu0 0.0
          %472 = vmatpush2.msra.mxu0 0.0
          %473 = vmatprep.subr.mxu0 0.0
          %474 = vmatpush2.msra.mxu0 0.0
          %475 = vmatprep.subr.mxu0 0.0
          %476 = vmatpush2.msra.mxu0 0.0
          %477 = vmatprep.subr.mxu0 0.0
          %478 = vmatpush2.msra.mxu0 0.0
          %479 = vmatprep.subr.mxu0 0.0
          %480 = vmatpush2.msra.mxu0 0.0
          %481 = vmatprep.subr.mxu0 0.0
          %482 = vmatpush2.msra.mxu0 0.0
          %483 = vmatprep.subr.mxu0 0.0
          %484 = vmatpush2.msra.mxu0 0.0
          %485 = vmatprep.subr.mxu0 0.0
          %486 = vmatpush2.msra.mxu0 0.0
          %487 = vmatprep.subr.mxu0 0.0
          %488 = vmatpush2.msra.mxu0 0.0
          %489 = vmatprep.subr.mxu0 0.0
          %490 = vmatpush2.msra.mxu0 0.0
          %491 = vmatprep.subr.mxu0 0.0
          %492 = vmatpush2.msra.mxu0 0.0
          %493 = vmatprep.subr.mxu0 0.0
          %494 = vmatpush2.msra.mxu0 0.0
          %495 = vmatprep.subr.mxu0 0.0
          %496 = vmatpush2.msra.mxu0 0.0
          %497 = vmatprep.mubr.f32.mxu0 0.0
          %498 = vmatmul.mubr.f32.gmra.mxu0 %v431
          %v499 = vpop.f32.mrf.mxu0
          %v500 = vadd.f32 %v427, %v499
          %v501 = vpop.f32.mrf.mxu0
          %502 = vdwg.mxu0
          %v503 = vmax.f32 %v500, 0.0
          %v505 = vlaneseq
          %v506 = vshrl.u32 %v505, 7
          %v507 = vsub.s32 0, %v506
          %v508 = vrot.slane %v364, %v507
          %vm510 = vcmask 15360
          %v512 = vsel %vm510, %v503, 0
          %vm514 = vcmask 1041408
          %v516 = vsel %vm514, %v362, 0
          %518 = vmatprep.subr.mxu0 0.0
          %519 = vmatpush1.msra.mxu0 0.0
          %520 = vmatprep.subr.mxu0 0.0
          %521 = vmatpush1.msra.mxu0 0.0
          %522 = vmatprep.subr.mxu0 0.0
          %523 = vmatpush1.msra.mxu0 0.0
          %524 = vmatprep.subr.mxu0 0.0
          %525 = vmatpush1.msra.mxu0 0.0
          %526 = vmatprep.subr.mxu0 0.0
          %527 = vmatpush1.msra.mxu0 0.0
          %528 = vmatprep.subr.mxu0 0.0
          %529 = vmatpush1.msra.mxu0 0.0
          %530 = vmatprep.subr.mxu0 0.0
          %531 = vmatpush1.msra.mxu0 0.0
          %532 = vmatprep.subr.mxu0 0.0
          %533 = vmatpush1.msra.mxu0 0.0
          %534 = vmatprep.subr.mxu0 0.0
          %535 = vmatpush1.msra.mxu0 0.0
          %536 = vmatprep.subr.mxu0 0.0
          %537 = vmatpush1.msra.mxu0 0.0
          %538 = vmatprep.subr.mxu0 0.0
          %539 = vmatpush1.msra.mxu0 0.0
          %540 = vmatprep.subr.mxu0 0.0
          %541 = vmatpush1.msra.mxu0 0.0
          %542 = vmatprep.subr.mxu0 0.0
          %543 = vmatpush1.msra.mxu0 0.0
          %544 = vmatprep.subr.mxu0 0.0
          %545 = vmatpush1.msra.mxu0 0.0
          %546 = vmatprep.subr.mxu0 0.0
          %547 = vmatpush1.msra.mxu0 0.0
          %548 = vmatprep.subr.mxu0 0.0
          %549 = vmatpush1.msra.mxu0 %v516
          %550 = vmatprep.subr.mxu0 0.0
          %551 = vmatpush2.msra.mxu0 0.0
          %552 = vmatprep.subr.mxu0 0.0
          %553 = vmatpush2.msra.mxu0 0.0
          %554 = vmatprep.subr.mxu0 0.0
          %555 = vmatpush2.msra.mxu0 0.0
          %556 = vmatprep.subr.mxu0 0.0
          %557 = vmatpush2.msra.mxu0 0.0
          %558 = vmatprep.subr.mxu0 0.0
          %559 = vmatpush2.msra.mxu0 0.0
          %560 = vmatprep.subr.mxu0 0.0
          %561 = vmatpush2.msra.mxu0 0.0
          %562 = vmatprep.subr.mxu0 0.0
          %563 = vmatpush2.msra.mxu0 0.0
          %564 = vmatprep.subr.mxu0 0.0
          %565 = vmatpush2.msra.mxu0 0.0
          %566 = vmatprep.subr.mxu0 0.0
          %567 = vmatpush2.msra.mxu0 0.0
          %568 = vmatprep.subr.mxu0 0.0
          %569 = vmatpush2.msra.mxu0 0.0
          %570 = vmatprep.subr.mxu0 0.0
          %571 = vmatpush2.msra.mxu0 0.0
          %572 = vmatprep.subr.mxu0 0.0
          %573 = vmatpush2.msra.mxu0 0.0
          %574 = vmatprep.subr.mxu0 0.0
          %575 = vmatpush2.msra.mxu0 0.0
          %576 = vmatprep.subr.mxu0 0.0
          %577 = vmatpush2.msra.mxu0 0.0
          %578 = vmatprep.subr.mxu0 0.0
          %579 = vmatpush2.msra.mxu0 0.0
          %580 = vmatprep.subr.mxu0 0.0
          %581 = vmatpush2.msra.mxu0 0.0
          %582 = vmatprep.mubr.f32.mxu0 0.0
          %583 = vmatmul.mubr.f32.gmra.mxu0 %v512
          %v584 = vpop.f32.mrf.mxu0
          %v585 = vadd.f32 %v508, %v584
          %v586 = vpop.f32.mrf.mxu0
          %587 = vdwg.mxu0
          %v589 = vrot.slane %v585, 1
          %v591 = vadd.f32 %v585, %v589
          %v592 = vmax.f32 %v591, 0.0
          %vm593 = vcmask 253952
          %594 = vst.msk [vmem:[%s257] sm:$0x1] %vm593, %v592
        $region52: #{tpu_custom_call.1} parent=39 // pred_fallthru
          _
        %s595 = sand.u32 %s154, 1
        %s596 = scalar_lea.sflag [#allocation6], %s595
        %s597 = sand.u32 %s154, 1
        %s598 = scalar_lea.vmem [#allocation7], %s597
        // Predicated region
        $region53: #{tpu_custom_call.1} parent=39 // pred_check
          %p599 = pneg %p164
        $region54: #{tpu_custom_call.1} parent=39 // pred_check_branch
          %601 = sbr.rel (%p599) target = $region56
        $region55: #{tpu_custom_call.1} parent=39 // pred_region
          %s603 = ssub.s32 16, 16
          %604 = vsyncadd %s596, %s603
          %s605 = smul.addr %s26, 16
          %s606 = scalar_lea.hbm %s5, %s605
          %s608 = sshll.u32 %s598, 4
          %s609 = int_to_ptr.vmem [resolvable:$true] %s608
          %611 = dma.vmem_to_hbm [thread:$0]  %s609, 16, %s606, %s596
        $region56: #{tpu_custom_call.1} parent=39 // pred_fallthru
          _
      $region40: #{tpu_custom_call.1} parent=5 // pred_fallthru
        _
      %p612 = scmp.le.s32.totalorder 2, %s17
      // Predicated region
      $region57: #{tpu_custom_call.1} parent=5 // pred_check
        %p613 = pneg %p612
      $region58: #{tpu_custom_call.1} parent=5 // pred_check_branch
        %615 = sbr.rel (%p613) target = $region60
      $region59: #{tpu_custom_call.1} parent=5 // pred_region
        %s616 = ssub.s32 %s17, 2
        // Predicated region
        $region61: #{tpu_custom_call.1} parent=59 // pred_check
          %p617 = pneg %p170
        $region62: #{tpu_custom_call.1} parent=59 // pred_check_branch
          %619 = sbr.rel (%p617) target = $region64
        $region63: #{tpu_custom_call.1} parent=59 // pred_region
          %s620 = sand.u32 %s155, 1
          %s621 = scalar_lea.sflag [#allocation6], %s620
          %s622 = sand.u32 %s155, 1
          %s623 = scalar_lea.vmem [#allocation7], %s622
          %624 = dma.done %s621, 16
        $region64: #{tpu_custom_call.1} parent=59 // pred_fallthru
          _
      $region60: #{tpu_custom_call.1} parent=5 // pred_fallthru
        _
    $region6: #{tpu_custom_call.1} parent=1 // loop_footer
      %s21 = sadd.s32 1, %s17
    $region7: #{tpu_custom_call.1} parent=1 // loop_footer_branch
      %16 = sbr.rel target = $region3
    $region8: #{tpu_custom_call.1} parent=1 // loop_exit
      _
    %625 = vsyncpa [#allocation5], 1
    %s626 = scalar_lea.sflag [#allocation5], 1
    %627 = vsyncpa %s626, 1
    %628 = vsyncpa [#allocation6], 1
    %s629 = scalar_lea.sflag [#allocation6], 1
    %630 = vsyncpa %s629, 1

</llo_original>
